<compile_context>
chip_gen: v5e
topology: v5e:2x2
jax: 0.10.0
libtpu: 0.0.40
codegen_flags: <defaults>
</compile_context>

<pallas_src>
import functools

import jax
import jax.numpy as jnp
from jax import lax
from jax.experimental import pallas as pl
from jax.experimental.pallas import tpu as pltpu


# ---------------------------------------------------------------------------
# Single-pass kernel: one grid step = a block of `bt` whole images.
# ---------------------------------------------------------------------------
def _lca_fused_kernel(x_ref, w1t_ref, b1_ref, w2t_ref, b2_ref, o_ref, *, inv_hw):
    x = x_ref[...]                                   # (bt, C, HW) f32

    # Spatial pooling: lane reductions straight to row form (C on lanes).
    avg = jnp.sum(x, axis=-1) * inv_hw               # (bt, C)
    mx = jnp.max(x, axis=-1)                         # (bt, C)

    w1t = w1t_ref[...]                               # (C, Cr)   == fc[0].weight.T
    b1 = b1_ref[...]                                 # (1, Cr)
    w2t = w2t_ref[...]                               # (Cr, C)   == fc[2].weight.T
    b2 = b2_ref[...]                                 # (1, C)

    def fc(v):                                       # (bt, C) -> (bt, C)
        h = jnp.dot(v, w1t, preferred_element_type=jnp.float32) + b1
        h = jnp.maximum(h, 0.0)
        y = jnp.dot(h, w2t, preferred_element_type=jnp.float32) + b2
        return jax.nn.sigmoid(y)

    att = fc(avg) + fc(mx)                           # (bt, C)
    o_ref[...] = x * att[:, :, None]                 # broadcast over HW lanes


# ---------------------------------------------------------------------------
# Fallback (image too big for one block): pass 1 accumulates pooled stats over
# spatial tiles and emits the per-image gate; pass 2 applies the gate.
# ---------------------------------------------------------------------------
def _lca_stats_kernel(x_ref, w1_ref, b1_ref, w2_ref, b2_ref, att_ref,
                      sum_s, max_s, *, hw_total, hw_tile, inv_hw):
    h_idx = pl.program_id(1)
    xblk = x_ref[...]                                # (1, C, hw_tile)
    c = x_ref.shape[1]

    # Mask only the ragged tail of the flattened spatial axis (tiny 1x1xHW mask).
    lane = lax.broadcasted_iota(jnp.int32, (1, 1, hw_tile), 2) + h_idx * hw_tile
    valid = lane < hw_total
    part_sum = jnp.sum(jnp.where(valid, xblk, 0.0), axis=-1, keepdims=True)      # (1,C,1)
    part_max = jnp.max(jnp.where(valid, xblk, -jnp.inf), axis=-1, keepdims=True)  # (1,C,1)

    @pl.when(h_idx == 0)
    def _():
        sum_s[...] = part_sum
        max_s[...] = part_max

    @pl.when(h_idx > 0)
    def _():
        sum_s[...] = sum_s[...] + part_sum
        max_s[...] = jnp.maximum(max_s[...], part_max)

    @pl.when(h_idx == pl.num_programs(1) - 1)
    def _():
        avg = sum_s[0] * inv_hw                      # (C, 1) column form
        mxc = max_s[0]                               # (C, 1)
        # Fuse avg/max into lanes 0/1 so the FC runs once as (.,2) matmuls.
        lane2 = lax.broadcasted_iota(jnp.int32, (c, 2), 1)
        stats = jnp.where(lane2 == 0,
                          jnp.broadcast_to(avg, (c, 2)),
                          jnp.broadcast_to(mxc, (c, 2)))          # (C, 2)
        h = jnp.dot(w1_ref[...], stats, preferred_element_type=jnp.float32) + b1_ref[...]
        h = jnp.maximum(h, 0.0)                                    # (Cr, 2)
        y = jnp.dot(w2_ref[...], h, preferred_element_type=jnp.float32) + b2_ref[...]
        y = jax.nn.sigmoid(y)                                      # (C, 2)
        att_ref[0] = jnp.sum(y, axis=-1, keepdims=True)            # (C, 1)


def _lca_apply_kernel(x_ref, att_ref, o_ref):
    o_ref[...] = x_ref[...] * att_ref[...]           # (1,C,hw) * (1,C,1)


# ---------------------------------------------------------------------------
# Wrappers
# ---------------------------------------------------------------------------
def _vmem_capacity_bytes():
    try:
        info = pltpu.get_tpu_info()
        cap = int(getattr(info, "vmem_capacity_bytes", 0))
        if cap > 0:
            return cap
    except Exception:
        pass
    return 64 << 20   # conservative default: v7x per-TensorCore VMEM


def _cdiv(a, b):
    return -(-a // b)


def _lca_single_pass(x_flat, w1, b1, w2, b2, block_target_bytes, vmem_cap):
    B, C, HW = x_flat.shape
    Cr = w1.shape[0]
    bytes_per_image = C * HW * 4

    # Largest batch tile that fits the block budget; no divisor constraint on B
    # (ragged final block is fine: pooled rows / att rows are per-image and
    # out-of-bounds stores are dropped).  Prefer an even grid-step count so
    # both v7x TensorCores get work on the "parallel" batch axis.
    bt = max(1, min(B, block_target_bytes // max(1, bytes_per_image)))
    if B >= 2 and bt >= B:
        bt = _cdiv(B, 2)
    n_blocks = _cdiv(B, bt)
    if n_blocks > 1 and n_blocks % 2 == 1:
        bt = _cdiv(B, n_blocks + 1)
        n_blocks = _cdiv(B, bt)

    block_bytes = bt * bytes_per_image
    # Honest footprint: 2 double-buffered input blocks + 2 output blocks plus
    # weights and small pooled/gate temporaries.
    vmem_limit = int(min(max(4 * block_bytes + (6 << 20), 32 << 20),
                         int(vmem_cap * 0.9)))

    kernel = functools.partial(_lca_fused_kernel, inv_hw=1.0 / float(HW))

    return pl.pallas_call(
        kernel,
        out_shape=jax.ShapeDtypeStruct((B, C, HW), jnp.float32),
        grid_spec=pltpu.PrefetchScalarGridSpec(
            num_scalar_prefetch=0,
            grid=(n_blocks,),
            in_specs=[
                pl.BlockSpec((bt, C, HW), lambda b: (b, 0, 0)),
                pl.BlockSpec((C, Cr), lambda b: (0, 0)),
                pl.BlockSpec((1, Cr), lambda b: (0, 0)),
                pl.BlockSpec((Cr, C), lambda b: (0, 0)),
                pl.BlockSpec((1, C), lambda b: (0, 0)),
            ],
            out_specs=pl.BlockSpec((bt, C, HW), lambda b: (b, 0, 0)),
        ),
        compiler_params=pltpu.CompilerParams(
            dimension_semantics=("parallel",),
            vmem_limit_bytes=vmem_limit,
        ),
    )(x_flat, jnp.transpose(w1), b1.reshape(1, Cr),
      jnp.transpose(w2), b2.reshape(1, C))


def _lca_two_pass(x_flat, w1, b1, w2, b2, block_target_bytes, vmem_cap):
    B, C, HW = x_flat.shape
    Cr = w1.shape[0]

    # Lane-dense spatial tile (multiple of 128) sized to the block budget.
    hw_tile = max(128, (block_target_bytes // (C * 4)) // 128 * 128)
    hw_tile = max(128, min(hw_tile, (HW // 128) * 128))
    n_hw = _cdiv(HW, hw_tile)

    block_bytes = C * hw_tile * 4
    vmem_limit = int(min(max(4 * block_bytes + (6 << 20), 32 << 20),
                         int(vmem_cap * 0.9)))

    w1c, b1c = w1, b1.reshape(Cr, 1)
    w2c, b2c = w2, b2.reshape(C, 1)

    # Pass 1: accumulate sum/max over spatial tiles, emit gate (B, C, 1).
    stats_kernel = functools.partial(_lca_stats_kernel, hw_total=HW,
                                     hw_tile=hw_tile, inv_hw=1.0 / float(HW))
    att = pl.pallas_call(
        stats_kernel,
        out_shape=jax.ShapeDtypeStruct((B, C, 1), jnp.float32),
        grid_spec=pltpu.PrefetchScalarGridSpec(
            num_scalar_prefetch=0,
            grid=(B, n_hw),
            in_specs=[
                pl.BlockSpec((1, C, hw_tile), lambda b, h: (b, 0, h)),
                pl.BlockSpec((Cr, C), lambda b, h: (0, 0)),
                pl.BlockSpec((Cr, 1), lambda b, h: (0, 0)),
                pl.BlockSpec((C, Cr), lambda b, h: (0, 0)),
                pl.BlockSpec((C, 1), lambda b, h: (0, 0)),
            ],
            out_specs=pl.BlockSpec((1, C, 1), lambda b, h: (b, 0, 0)),
            scratch_shapes=[pltpu.VMEM((1, C, 1), jnp.float32),
                            pltpu.VMEM((1, C, 1), jnp.float32)],
        ),
        compiler_params=pltpu.CompilerParams(
            dimension_semantics=("parallel", "arbitrary"),
            vmem_limit_bytes=vmem_limit,
        ),
    )(x_flat, w1c, b1c, w2c, b2c)

    # Pass 2: apply the gate (re-reads x; only used when one image is too big
    # for the single-pass block budget).
    return pl.pallas_call(
        _lca_apply_kernel,
        out_shape=jax.ShapeDtypeStruct((B, C, HW), jnp.float32),
        grid_spec=pltpu.PrefetchScalarGridSpec(
            num_scalar_prefetch=0,
            grid=(B, n_hw),
            in_specs=[
                pl.BlockSpec((1, C, hw_tile), lambda b, h: (b, 0, h)),
                pl.BlockSpec((1, C, 1), lambda b, h: (b, 0, 0)),
            ],
            out_specs=pl.BlockSpec((1, C, hw_tile), lambda b, h: (b, 0, h)),
        ),
        compiler_params=pltpu.CompilerParams(
            dimension_semantics=("parallel", "parallel"),
            vmem_limit_bytes=vmem_limit,
        ),
    )(x_flat, att)


def light_channel_attention(x_nchw, w1, b1, w2, b2, *, block_target_bytes=None,
                            force_spatial_tiling=False):
    """x_nchw: (B, C, H, W) float32; torch-Linear weights w1 (Cr,C), b1 (Cr,),
    w2 (C,Cr), b2 (C,). Returns (B, C, H, W)."""
    B, C, H, W = x_nchw.shape
    HW = H * W
    x_flat = x_nchw.reshape(B, C, HW)

    vmem_cap = _vmem_capacity_bytes()
    if block_target_bytes is None:
        # v7x (64 MiB VMEM) -> ~8 MiB blocks; v5e/v6e (128 MiB) -> ~16 MiB.
        block_target_bytes = max(2 << 20, min(16 << 20, vmem_cap // 8))

    bytes_per_image = C * HW * 4
    use_spatial = force_spatial_tiling or (bytes_per_image > block_target_bytes
                                           and HW >= 256)
    if use_spatial:
        out_flat = _lca_two_pass(x_flat, w1, b1, w2, b2, block_target_bytes, vmem_cap)
    else:
        out_flat = _lca_single_pass(x_flat, w1, b1, w2, b2, block_target_bytes, vmem_cap)
    return out_flat.reshape(B, C, H, W)


def _reference(x, w1, b1, w2, b2):
    avg = jnp.mean(x, axis=(2, 3))                 # (B, C)
    mx = jnp.max(x, axis=(2, 3))                   # (B, C)

    def fc(v):                                     # torch Linear: v @ W.T + b
        h = jnp.maximum(v @ w1.T + b1, 0.0)
        return jax.nn.sigmoid(h @ w2.T + b2)

    att = fc(avg) + fc(mx)                         # (B, C)
    return x * att[:, :, None, None]


if __name__ == "__main__":
    B, C, H, W = 2, 16, 16, 16
    reduction = 8
    Cr = C // reduction

    key = jax.random.PRNGKey(0)
    kx, k1, k2, k3, k4 = jax.random.split(key, 5)

    x = jax.random.normal(kx, (B, C, H, W), dtype=jnp.float32)

    # torch Linear-style parameter shapes / init bounds.
    bound1 = 1.0 / float(C) ** 0.5
    bound2 = 1.0 / float(Cr) ** 0.5
    w1 = jax.random.uniform(k1, (Cr, C), jnp.float32, -bound1, bound1)
    b1 = jax.random.uniform(k2, (Cr,), jnp.float32, -bound1, bound1)
    w2 = jax.random.uniform(k3, (C, Cr), jnp.float32, -bound2, bound2)
    b2 = jax.random.uniform(k4, (C,), jnp.float32, -bound2, bound2)

    ref = _reference(x, w1, b1, w2, b2)

    # Main single-pass (batch-blocked) path.
    out = jax.block_until_ready(light_channel_attention(x, w1, b1, w2, b2))
    assert out.shape == (B, C, H, W)
    assert jnp.allclose(out, ref, atol=1e-5, rtol=1e-5), "single-pass mismatch vs reference"

    # Exercise the spatial-tiled fallback (forced small block budget).
    out2 = jax.block_until_ready(
        light_channel_attention(x, w1, b1, w2, b2,
                                block_target_bytes=8192,
                                force_spatial_tiling=True))
    assert jnp.allclose(out2, ref, atol=1e-5, rtol=1e-5), "two-pass mismatch vs reference"

    print("KERNEL_OK")
</pallas_src>

<mosaic_0001>
module attributes {stable_mosaic.version = 11 : i64} {
  func.func @_lca_fused_kernel(%arg0: i32, %arg1: memref<1x16x256xf32, #tpu.memory_space<vmem>>, %arg2: memref<16x2xf32, #tpu.memory_space<vmem>>, %arg3: memref<1x2xf32, #tpu.memory_space<vmem>>, %arg4: memref<2x16xf32, #tpu.memory_space<vmem>>, %arg5: memref<1x16xf32, #tpu.memory_space<vmem>>, %arg6: memref<1x16x256xf32, #tpu.memory_space<vmem>>) attributes {dimension_semantics = [#tpu.dimension_semantics<parallel>], iteration_bounds = array<i64: 2>, scalar_prefetch = 0 : i64, scratch_operands = 0 : i64, tpu.core_type = #tpu.core_type<tc>, window_params = [{transform_indices = @transform_0, window_bounds = array<i64: 1, 16, 256>}, {pipeline_mode = #tpu.pipeline_mode<synchronous>, transform_indices = @transform_1, window_bounds = array<i64: 16, 2>}, {pipeline_mode = #tpu.pipeline_mode<synchronous>, transform_indices = @transform_2, window_bounds = array<i64: 1, 2>}, {pipeline_mode = #tpu.pipeline_mode<synchronous>, transform_indices = @transform_3, window_bounds = array<i64: 2, 16>}, {pipeline_mode = #tpu.pipeline_mode<synchronous>, transform_indices = @transform_4, window_bounds = array<i64: 1, 16>}, {transform_indices = @transform_5, window_bounds = array<i64: 1, 16, 256>}]} {
    %c0 = arith.constant 0 : index
    %c0_0 = arith.constant 0 : index
    %c0_1 = arith.constant 0 : index
    %0 = vector.load %arg1[%c0, %c0_0, %c0_1] : memref<1x16x256xf32, #tpu.memory_space<vmem>>, vector<1x16x256xf32>
    %cst = arith.constant dense<0.000000e+00> : vector<1x16xf32>
    %1 = vector.multi_reduction <add>, %0, %cst [2] : vector<1x16x256xf32> to vector<1x16xf32>
    %cst_2 = arith.constant 3.906250e-03 : f32
    %2 = vector.broadcast %cst_2 : f32 to vector<1x16xf32>
    %3 = arith.mulf %1, %2 : vector<1x16xf32>
    %cst_3 = arith.constant dense<0xFF800000> : vector<1x16xf32>
    %4 = vector.multi_reduction <maximumf>, %0, %cst_3 [2] : vector<1x16x256xf32> to vector<1x16xf32>
    %c0_4 = arith.constant 0 : index
    %c0_5 = arith.constant 0 : index
    %5 = vector.load %arg2[%c0_4, %c0_5] : memref<16x2xf32, #tpu.memory_space<vmem>>, vector<16x2xf32>
    %c0_6 = arith.constant 0 : index
    %c0_7 = arith.constant 0 : index
    %6 = vector.load %arg3[%c0_6, %c0_7] : memref<1x2xf32, #tpu.memory_space<vmem>>, vector<1x2xf32>
    %c0_8 = arith.constant 0 : index
    %c0_9 = arith.constant 0 : index
    %7 = vector.load %arg4[%c0_8, %c0_9] : memref<2x16xf32, #tpu.memory_space<vmem>>, vector<2x16xf32>
    %c0_10 = arith.constant 0 : index
    %c0_11 = arith.constant 0 : index
    %8 = vector.load %arg5[%c0_10, %c0_11] : memref<1x16xf32, #tpu.memory_space<vmem>>, vector<1x16xf32>
    %cst_12 = arith.constant dense<0.000000e+00> : vector<1x2xf32>
    %9 = tpu.matmul %3, %5, %cst_12 {dimension_numbers = #tpu.dot_dimension_numbers<[1], [0], [0], [1], [0, 0, 1, 1], [], []>} : vector<1x16xf32>, vector<16x2xf32>, vector<1x2xf32> -> vector<1x2xf32>
    %10 = arith.addf %9, %6 : vector<1x2xf32>
    %cst_13 = arith.constant 0.000000e+00 : f32
    %11 = vector.broadcast %cst_13 : f32 to vector<1x2xf32>
    %12 = arith.maximumf %10, %11 : vector<1x2xf32>
    %cst_14 = arith.constant dense<0.000000e+00> : vector<1x16xf32>
    %13 = tpu.matmul %12, %7, %cst_14 {dimension_numbers = #tpu.dot_dimension_numbers<[1], [0], [0], [1], [0, 0, 1, 1], [], []>} : vector<1x2xf32>, vector<2x16xf32>, vector<1x16xf32> -> vector<1x16xf32>
    %14 = arith.addf %13, %8 : vector<1x16xf32>
    %15 = arith.negf %14 : vector<1x16xf32>
    %16 = math.exp %15 : vector<1x16xf32>
    %cst_15 = arith.constant 1.000000e+00 : f32
    %17 = vector.broadcast %cst_15 : f32 to vector<1x16xf32>
    %18 = arith.addf %17, %16 : vector<1x16xf32>
    %19 = arith.divf %17, %18 : vector<1x16xf32>
    %cst_16 = arith.constant dense<0.000000e+00> : vector<1x2xf32>
    %20 = tpu.matmul %4, %5, %cst_16 {dimension_numbers = #tpu.dot_dimension_numbers<[1], [0], [0], [1], [0, 0, 1, 1], [], []>} : vector<1x16xf32>, vector<16x2xf32>, vector<1x2xf32> -> vector<1x2xf32>
    %21 = arith.addf %20, %6 : vector<1x2xf32>
    %cst_17 = arith.constant 0.000000e+00 : f32
    %22 = vector.broadcast %cst_17 : f32 to vector<1x2xf32>
    %23 = arith.maximumf %21, %22 : vector<1x2xf32>
    %cst_18 = arith.constant dense<0.000000e+00> : vector<1x16xf32>
    %24 = tpu.matmul %23, %7, %cst_18 {dimension_numbers = #tpu.dot_dimension_numbers<[1], [0], [0], [1], [0, 0, 1, 1], [], []>} : vector<1x2xf32>, vector<2x16xf32>, vector<1x16xf32> -> vector<1x16xf32>
    %25 = arith.addf %24, %8 : vector<1x16xf32>
    %26 = arith.negf %25 : vector<1x16xf32>
    %27 = math.exp %26 : vector<1x16xf32>
    %cst_19 = arith.constant 1.000000e+00 : f32
    %28 = vector.broadcast %cst_19 : f32 to vector<1x16xf32>
    %29 = arith.addf %28, %27 : vector<1x16xf32>
    %30 = arith.divf %28, %29 : vector<1x16xf32>
    %31 = arith.addf %19, %30 : vector<1x16xf32>
    %32 = vector.shape_cast %31 : vector<1x16xf32> to vector<1x16x1xf32>
    %33 = vector.broadcast %32 : vector<1x16x1xf32> to vector<1x16x256xf32>
    %34 = arith.mulf %0, %33 : vector<1x16x256xf32>
    %c0_20 = arith.constant 0 : index
    %c0_21 = arith.constant 0 : index
    %c0_22 = arith.constant 0 : index
    %35 = vector.load %arg6[%c0_20, %c0_21, %c0_22] : memref<1x16x256xf32, #tpu.memory_space<vmem>>, vector<1x16x256xf32>
    tpu.vector_store %arg6[%c0_20, %c0_21, %c0_22], %34 {strides = array<i32>} : memref<1x16x256xf32, #tpu.memory_space<vmem>>, vector<1x16x256xf32>,
    return
  }
  func.func @transform_0(%arg0: i32) -> (i32, i32, i32) {
    %c0_i32 = arith.constant 0 : i32
    %c0_i32_0 = arith.constant 0 : i32
    %c0_i32_1 = arith.constant 0 : i32
    return %arg0, %c0_i32, %c0_i32_0 : i32, i32, i32
  }
  func.func @transform_1(%arg0: i32) -> (i32, i32) {
    %c0_i32 = arith.constant 0 : i32
    %c0_i32_0 = arith.constant 0 : i32
    %c0_i32_1 = arith.constant 0 : i32
    return %c0_i32, %c0_i32_0 : i32, i32
  }
  func.func @transform_2(%arg0: i32) -> (i32, i32) {
    %c0_i32 = arith.constant 0 : i32
    %c0_i32_0 = arith.constant 0 : i32
    %c0_i32_1 = arith.constant 0 : i32
    return %c0_i32, %c0_i32_0 : i32, i32
  }
  func.func @transform_3(%arg0: i32) -> (i32, i32) {
    %c0_i32 = arith.constant 0 : i32
    %c0_i32_0 = arith.constant 0 : i32
    %c0_i32_1 = arith.constant 0 : i32
    return %c0_i32, %c0_i32_0 : i32, i32
  }
  func.func @transform_4(%arg0: i32) -> (i32, i32) {
    %c0_i32 = arith.constant 0 : i32
    %c0_i32_0 = arith.constant 0 : i32
    %c0_i32_1 = arith.constant 0 : i32
    return %c0_i32, %c0_i32_0 : i32, i32
  }
  func.func @transform_5(%arg0: i32) -> (i32, i32, i32) {
    %c0_i32 = arith.constant 0 : i32
    %c0_i32_0 = arith.constant 0 : i32
    %c0_i32_1 = arith.constant 0 : i32
    return %arg0, %c0_i32, %c0_i32_0 : i32, i32, i32
  }
}

</mosaic_0001>

<llo_original>
// kernel: tpu_custom_call.1
$region0: #{tpu_custom_call.1}
  #allocation0 [shape = 'u32[]', space=smem, size = 0x4, offset = 0x4, fixed_abs, tag = 'smem constant byte address 0x4 - core index']
  #allocation1 [shape = 'u32[72,128]{1,0:T(1,128)}', space=vmem, size = 0x9000, scoped, tag = 'internal scratch']
  %s0 = inlined_call_operand.hbm [shape: f32[2,16,256], index: 0, kind: input, shape index: {}]
  %s1 = inlined_call_operand.vmem [shape: f32[16,2], index: 1, kind: input, shape index: {}]
  %s2 = inlined_call_operand.vmem [shape: f32[1,2], index: 2, kind: input, shape index: {}]
  %s3 = inlined_call_operand.vmem [shape: f32[2,16], index: 3, kind: input, shape index: {}]
  %s4 = inlined_call_operand.vmem [shape: f32[1,16], index: 4, kind: input, shape index: {}]
  %s5 = inlined_call_operand.hbm [shape: f32[2,16,256], index: 5, kind: output, shape index: {}]
  %s6 = sld [smem:[#allocation0]]
  $region57: #{tpu_custom_call.1} parent=0
    _
  %s8 = ssub.s32 1, %s6
  %s9 = scalar_select 0, %s8, %s6
  $region1: #{tpu_custom_call.1} parent=0
    #allocation2 [shape = 'u8[32768]{0}', space=vmem, size = 0x8000, scoped, tag = 'input window, operand 0']
    #allocation3 [shape = 's32[2]{0}', space=sflag, size = 0x8, scoped, tag = 'scoped memory for tpu_custom_call.1']
    #allocation4 [shape = 's32[2]{0}', space=sflag, size = 0x8, scoped, tag = 'scoped memory for tpu_custom_call.1']
    #allocation5 [shape = 'u8[32768]{0}', space=vmem, size = 0x8000, scoped, tag = 'output window, operand 0']
    %10 = vsyncpa [#allocation3], 0
    %s11 = scalar_lea.sflag [#allocation3], 1
    %12 = vsyncpa %s11, 0
    %13 = vsyncpa [#allocation4], 0
    %s14 = scalar_lea.sflag [#allocation4], 1
    %15 = vsyncpa %s14, 0
    loop: start=0, step=1, limit=4
    $region2: #{tpu_custom_call.1} parent=1 // loop_pre_header
      _
    $region3: #{tpu_custom_call.1} parent=1 // loop_header
      %s17 = sphi 0, %s21
      %p18 = scmp.ge.s32.totalorder %s17, 4
      %s27 = sphi 0, %s29
      %s30 = sphi 0, %s27
      %s31 = sphi 0, %s30
      %s47 = sphi 0, %s31
      %s51 = sphi 0, %s51
      %s53 = sphi 0, %s51
      %s54 = sphi 0, %s53
      %s68 = sphi 0, %s54
      %s72 = sphi 0, %s72
      %s74 = sphi 0, %s72
      %s75 = sphi 0, %s74
      %s89 = sphi 0, %s75
      %s93 = sphi 0, %s93
      %s95 = sphi 0, %s93
      %s96 = sphi 0, %s95
      %s110 = sphi 0, %s96
      %s114 = sphi 0, %s114
      %s116 = sphi 0, %s114
      %s117 = sphi 0, %s116
      %s131 = sphi 0, %s117
      %s137 = sphi 0, %s139
      %s140 = sphi 0, %s137
      %s141 = sphi 0, %s140
      %s157 = sphi 0, %s141
    $region4: #{tpu_custom_call.1} parent=1 // loop_header_branch
      %20 = sbr.rel (%p18) target = $region8
    $region5: #{tpu_custom_call.1} parent=1 // loop_body
      %s22 = ssub.s32 %s17, 1
      %s23 = ssub.s32 %s17, 2
      %s24 = sadd.s32 %s17, 1
      %s25 = ssub.s32 %s17, %s24
      %p26 = scmp.eq.s32.totalorder %s25, 0
      %s28 = sadd.s32 %s27, 1
      %s29 = scalar_select %p26, %s27, %s28
      %p32 = pneg %p26
      %p33 = scmp.eq.s32.totalorder %s17, 1
      %p34 = por %p32, %p33
      %p35 = scmp.ne.s32.totalorder %s27, %s30
      %p36 = scmp.eq.s32.totalorder %s17, 0
      %p37 = por %p35, %p36
      %p38 = scmp.ne.s32.totalorder %s27, %s30
      %p39 = scmp.eq.s32.totalorder %s22, 1
      %p40 = por %p38, %p39
      %p41 = scmp.ne.s32.totalorder %s30, %s31
      %p42 = scmp.eq.s32.totalorder %s22, 0
      %p43 = por %p41, %p42
      %p44 = scmp.ne.s32.totalorder %s30, %s31
      %p45 = scmp.eq.s32.totalorder %s23, 1
      %p46 = por %p44, %p45
      %p48 = scmp.ne.s32.totalorder %s31, %s47
      %p49 = scmp.eq.s32.totalorder %s23, 0
      %p50 = por %p48, %p49
      %s52 = sadd.s32 %s51, 1
      %p55 = scmp.eq.s32.totalorder %s17, 1
      %p56 = scmp.ne.s32.totalorder %s51, %s53
      %p57 = scmp.eq.s32.totalorder %s17, 0
      %p58 = por %p56, %p57
      %p59 = scmp.ne.s32.totalorder %s51, %s53
      %p60 = scmp.eq.s32.totalorder %s22, 1
      %p61 = por %p59, %p60
      %p62 = scmp.ne.s32.totalorder %s53, %s54
      %p63 = scmp.eq.s32.totalorder %s22, 0
      %p64 = por %p62, %p63
      %p65 = scmp.ne.s32.totalorder %s53, %s54
      %p66 = scmp.eq.s32.totalorder %s23, 1
      %p67 = por %p65, %p66
      %p69 = scmp.ne.s32.totalorder %s54, %s68
      %p70 = scmp.eq.s32.totalorder %s23, 0
      %p71 = por %p69, %p70
      %s73 = sadd.s32 %s72, 1
      %p76 = scmp.eq.s32.totalorder %s17, 1
      %p77 = scmp.ne.s32.totalorder %s72, %s74
      %p78 = scmp.eq.s32.totalorder %s17, 0
      %p79 = por %p77, %p78
      %p80 = scmp.ne.s32.totalorder %s72, %s74
      %p81 = scmp.eq.s32.totalorder %s22, 1
      %p82 = por %p80, %p81
      %p83 = scmp.ne.s32.totalorder %s74, %s75
      %p84 = scmp.eq.s32.totalorder %s22, 0
      %p85 = por %p83, %p84
      %p86 = scmp.ne.s32.totalorder %s74, %s75
      %p87 = scmp.eq.s32.totalorder %s23, 1
      %p88 = por %p86, %p87
      %p90 = scmp.ne.s32.totalorder %s75, %s89
      %p91 = scmp.eq.s32.totalorder %s23, 0
      %p92 = por %p90, %p91
      %s94 = sadd.s32 %s93, 1
      %p97 = scmp.eq.s32.totalorder %s17, 1
      %p98 = scmp.ne.s32.totalorder %s93, %s95
      %p99 = scmp.eq.s32.totalorder %s17, 0
      %p100 = por %p98, %p99
      %p101 = scmp.ne.s32.totalorder %s93, %s95
      %p102 = scmp.eq.s32.totalorder %s22, 1
      %p103 = por %p101, %p102
      %p104 = scmp.ne.s32.totalorder %s95, %s96
      %p105 = scmp.eq.s32.totalorder %s22, 0
      %p106 = por %p104, %p105
      %p107 = scmp.ne.s32.totalorder %s95, %s96
      %p108 = scmp.eq.s32.totalorder %s23, 1
      %p109 = por %p107, %p108
      %p111 = scmp.ne.s32.totalorder %s96, %s110
      %p112 = scmp.eq.s32.totalorder %s23, 0
      %p113 = por %p111, %p112
      %s115 = sadd.s32 %s114, 1
      %p118 = scmp.eq.s32.totalorder %s17, 1
      %p119 = scmp.ne.s32.totalorder %s114, %s116
      %p120 = scmp.eq.s32.totalorder %s17, 0
      %p121 = por %p119, %p120
      %p122 = scmp.ne.s32.totalorder %s114, %s116
      %p123 = scmp.eq.s32.totalorder %s22, 1
      %p124 = por %p122, %p123
      %p125 = scmp.ne.s32.totalorder %s116, %s117
      %p126 = scmp.eq.s32.totalorder %s22, 0
      %p127 = por %p125, %p126
      %p128 = scmp.ne.s32.totalorder %s116, %s117
      %p129 = scmp.eq.s32.totalorder %s23, 1
      %p130 = por %p128, %p129
      %p132 = scmp.ne.s32.totalorder %s117, %s131
      %p133 = scmp.eq.s32.totalorder %s23, 0
      %p134 = por %p132, %p133
      %s135 = ssub.s32 %s17, %s24
      %p136 = scmp.eq.s32.totalorder %s135, 0
      %s138 = sadd.s32 %s137, 1
      %s139 = scalar_select %p136, %s137, %s138
      %p142 = pneg %p136
      %p143 = scmp.eq.s32.totalorder %s17, 1
      %p144 = por %p142, %p143
      %p145 = scmp.ne.s32.totalorder %s137, %s140
      %p146 = scmp.eq.s32.totalorder %s17, 0
      %p147 = por %p145, %p146
      %p148 = scmp.ne.s32.totalorder %s137, %s140
      %p149 = scmp.eq.s32.totalorder %s22, 1
      %p150 = por %p148, %p149
      %p151 = scmp.ne.s32.totalorder %s140, %s141
      %p152 = scmp.eq.s32.totalorder %s22, 0
      %p153 = por %p151, %p152
      %p154 = scmp.ne.s32.totalorder %s140, %s141
      %p155 = scmp.eq.s32.totalorder %s23, 1
      %p156 = por %p154, %p155
      %p158 = scmp.ne.s32.totalorder %s141, %s157
      %p159 = scmp.eq.s32.totalorder %s23, 0
      %p160 = por %p158, %p159
      %p161 = scmp.le.s32.totalorder 1, %s17
      %p162 = scmp.lt.s32.totalorder %s17, 3
      %p163 = pnand %p161, %p162
      %p164 = pneg %p163
      // Predicated region
      $region9: #{tpu_custom_call.1} parent=5 // pred_check
        _
      $region10: #{tpu_custom_call.1} parent=5 // pred_check_branch
        %166 = sbr.rel (%p163) target = $region12
      $region11: #{tpu_custom_call.1} parent=5 // pred_region
        %s167 = ssub.s32 %s17, 1
        // Predicated region
        $region13: #{tpu_custom_call.1} parent=11 // pred_check
          %p168 = pneg %p64
        $region14: #{tpu_custom_call.1} parent=11 // pred_check_branch
          %170 = sbr.rel (%p168) target = $region16
        $region15: #{tpu_custom_call.1} parent=11 // pred_region
          _
        $region16: #{tpu_custom_call.1} parent=11 // pred_fallthru
          _
        // Predicated region
        $region17: #{tpu_custom_call.1} parent=11 // pred_check
          %p171 = pneg %p85
        $region18: #{tpu_custom_call.1} parent=11 // pred_check_branch
          %173 = sbr.rel (%p171) target = $region20
        $region19: #{tpu_custom_call.1} parent=11 // pred_region
          _
        $region20: #{tpu_custom_call.1} parent=11 // pred_fallthru
          _
        // Predicated region
        $region21: #{tpu_custom_call.1} parent=11 // pred_check
          %p174 = pneg %p106
        $region22: #{tpu_custom_call.1} parent=11 // pred_check_branch
          %176 = sbr.rel (%p174) target = $region24
        $region23: #{tpu_custom_call.1} parent=11 // pred_region
          _
        $region24: #{tpu_custom_call.1} parent=11 // pred_fallthru
          _
        // Predicated region
        $region25: #{tpu_custom_call.1} parent=11 // pred_check
          %p177 = pneg %p127
        $region26: #{tpu_custom_call.1} parent=11 // pred_check_branch
          %179 = sbr.rel (%p177) target = $region28
        $region27: #{tpu_custom_call.1} parent=11 // pred_region
          _
        $region28: #{tpu_custom_call.1} parent=11 // pred_fallthru
          _
      $region12: #{tpu_custom_call.1} parent=5 // pred_fallthru
        _
      %p180 = scmp.lt.s32.totalorder %s17, 2
      // Predicated region
      $region29: #{tpu_custom_call.1} parent=5 // pred_check
        %p181 = pneg %p180
      $region30: #{tpu_custom_call.1} parent=5 // pred_check_branch
        %183 = sbr.rel (%p181) target = $region32
      $region31: #{tpu_custom_call.1} parent=5 // pred_region
        // Predicated region
        $region33: #{tpu_custom_call.1} parent=31 // pred_check
          %p184 = pneg %p37
        $region34: #{tpu_custom_call.1} parent=31 // pred_check_branch
          %186 = sbr.rel (%p184) target = $region36
        $region35: #{tpu_custom_call.1} parent=31 // pred_region
          %s187 = sand.u32 %s27, 1
          %s188 = scalar_lea.sflag [#allocation3], %s187
          %s189 = sand.u32 %s27, 1
          %s190 = smul.addr %s189, 32
          %s191 = scalar_lea.vmem [#allocation2], %s190
          %193 = vsyncadd %s188, 0
          %s194 = smul.addr %s17, 4
          %s195 = smul.addr %s194, 8
          %s196 = scalar_lea.hbm %s0, %s195
          %s197 = sshll.u32 %s196, 4
          %s198 = int_to_ptr.hbm [resolvable:$true] %s197
          %s199 = sshll.u32 %s191, 4
          %s200 = int_to_ptr.vmem [resolvable:$true] %s199
          %205 = dma.hbm_to_vmem [thread:$0]  %s198, 512, %s200, %s188, 256, 256, 16
        $region36: #{tpu_custom_call.1} parent=31 // pred_fallthru
          _
      $region32: #{tpu_custom_call.1} parent=5 // pred_fallthru
        _
      %p206 = scmp.le.s32.totalorder 1, %s17
      %p207 = scmp.lt.s32.totalorder %s17, 3
      %p208 = pnand %p206, %p207
      %p209 = pneg %p208
      // Predicated region
      $region37: #{tpu_custom_call.1} parent=5 // pred_check
        _
      $region38: #{tpu_custom_call.1} parent=5 // pred_check_branch
        %211 = sbr.rel (%p208) target = $region40
      $region39: #{tpu_custom_call.1} parent=5 // pred_region
        %s212 = ssub.s32 %s17, 1
        %s213 = sand.u32 %s30, 1
        %s214 = scalar_lea.sflag [#allocation3], %s213
        %s215 = sand.u32 %s30, 1
        %s216 = smul.addr %s215, 32
        %s217 = scalar_lea.vmem [#allocation2], %s216
        // Predicated region
        $region41: #{tpu_custom_call.1} parent=39 // pred_check
          %p218 = pneg %p43
        $region42: #{tpu_custom_call.1} parent=39 // pred_check_branch
          %220 = sbr.rel (%p218) target = $region44
        $region43: #{tpu_custom_call.1} parent=39 // pred_region
          %222 = dma.done %s214, 512
        $region44: #{tpu_custom_call.1} parent=39 // pred_fallthru
          _
        %s223 = sand.u32 %s30, 1
        %s224 = scalar_lea.sflag [#allocation3], %s223
        %s225 = sand.u32 %s30, 1
        %s226 = smul.addr %s225, 32
        %s227 = scalar_lea.vmem [#allocation2], %s226
        %p228 = pneg %p43
        %p229 = pneg %p40
        %p230 = pneg %p64
        %p231 = pneg %p61
        %p232 = pneg %p85
        %p233 = pneg %p82
        %p234 = pneg %p106
        %p235 = pneg %p103
        %p236 = pneg %p127
        %p237 = pneg %p124
        %p238 = pneg %p153
        %p239 = pneg %p150
        %s240 = sand.u32 %s140, 1
        %s241 = scalar_lea.sflag [#allocation4], %s240
        %s242 = sand.u32 %s140, 1
        %s243 = smul.addr %s242, 32
        %s244 = scalar_lea.vmem [#allocation5], %s243
        %v245 = vld [vmem:[%s217] sm:$0xff]
        %v246 = vld [vmem:[%s217 + $0x8] sm:$0xff]
        %v247 = vld [vmem:[%s217 + $0x10] sm:$0xff]
        %v248 = vld [vmem:[%s217 + $0x18] sm:$0xff]
        %v249 = vadd.f32 %v245, %v246
        %250 = vadd.xlane.f32.xlu0 %v249
        %v251 = vpop.xlane.xlu0 %250
        %v252 = vadd.f32 %v247, %v248
        %253 = vadd.xlane.f32.xlu0 %v252
        %v254 = vpop.xlane.xlu0 %253
        %v255 = vmul.f32 %v251, 0.00390625
        %v256 = vmul.f32 %v254, 0.00390625
        %v257 = vmax.f32 %v245, %v246
        %258 = vmax.xlane.f32.xlu0 %v257
        %v259 = vpop.xlane.xlu0 %258
        %v260 = vmax.f32 %v247, %v248
        %261 = vmax.xlane.f32.xlu0 %v260
        %v262 = vpop.xlane.xlu0 %261
        %v263 = vld [vmem:[%s1] sm:$0xff]
        %v264 = vld [vmem:[%s1 + $0x8] sm:$0xff]
        %v265 = vld [vmem:[%s2] sm:$0x1]
        %v266 = vld [vmem:[%s3] sm:$0x3]
        %v267 = vld [vmem:[%s4] sm:$0x1]
        %v270 = vlaneseq
        %v271 = vand.u32 %v270, 127
        %v272 = vperm.slane %v255, %v271
        %v273 = vadd.s32 %v271, 4294967288
        %v274 = vperm.slane %v256, %v273
        %vm275 = vcmask 130112
        %v276 = vsel %vm275, %v274, %v272
        %vm277 = vcmask 130048
        %v278 = vsel %vm277, %v276, 0
        %280 = vmatpush.msra.mxu0 0.0
        %281 = vmatpush.msra.mxu0 0.0
        %282 = vmatpush.msra.mxu0 0.0
        %283 = vmatpush.msra.mxu0 0.0
        %284 = vmatpush.msra.mxu0 0.0
        %285 = vmatpush.msra.mxu0 0.0
        %286 = vmatpush.msra.mxu0 0.0
        %287 = vmatpush.msra.mxu0 0.0
        %288 = vmatpush.msra.mxu0 0.0
        %289 = vmatpush.msra.mxu0 0.0
        %290 = vmatpush.msra.mxu0 0.0
        %291 = vmatpush.msra.mxu0 0.0
        %292 = vmatpush.msra.mxu0 0.0
        %293 = vmatpush.msra.mxu0 0.0
        %294 = vmatpush.msra.mxu0 %v264
        %295 = vmatpush.msra.mxu0 %v263
        %296 = vmatmul.f32.gmra.mxu0 %v278
        %v297 = vpop.f32.mrf.mxu0
        %v298 = vadd.f32 %v265, %v297
        %299 = vdwg.mxu0
        %v300 = vmax.f32 %v298, 0.0
        %vm301 = vcmask 15360
        %v303 = vsel %vm301, %v300, 0
        %vm305 = vcmask 1041408
        %v307 = vsel %vm305, %v266, 0
        %309 = vmatpush.msra.mxu0 0.0
        %310 = vmatpush.msra.mxu0 0.0
        %311 = vmatpush.msra.mxu0 0.0
        %312 = vmatpush.msra.mxu0 0.0
        %313 = vmatpush.msra.mxu0 0.0
        %314 = vmatpush.msra.mxu0 0.0
        %315 = vmatpush.msra.mxu0 0.0
        %316 = vmatpush.msra.mxu0 0.0
        %317 = vmatpush.msra.mxu0 0.0
        %318 = vmatpush.msra.mxu0 0.0
        %319 = vmatpush.msra.mxu0 0.0
        %320 = vmatpush.msra.mxu0 0.0
        %321 = vmatpush.msra.mxu0 0.0
        %322 = vmatpush.msra.mxu0 0.0
        %323 = vmatpush.msra.mxu0 0.0
        %324 = vmatpush.msra.mxu0 %v307
        %325 = vmatmul.f32.gmra.mxu0 %v303
        %v326 = vpop.f32.mrf.mxu0
        %v327 = vadd.f32 %v267, %v326
        %328 = vdwg.mxu0
        %v329 = vxor.u32 %v327, 2147483648
        %v330 = vmul.f32 %v329, 1.442695
        %v331 = vpow.pop %v330
        %v332 = vadd.f32 %v331, 1.0
        %v333 = vrcp.pop %v332
        %v334 = vmul.f32 %v332, %v333
        %v335 = vsub.f32 1.0, %v334
        %v336 = vmul.f32 %v333, %v335
        %v337 = vadd.f32 %v333, %v336
        %vm338 = vweird.f32 %v332
        %vm339 = vweird.f32 %v333
        %vm340 = vmor %vm338, %vm339
        %v341 = vsel %vm340, %v333, %v337
        %v342 = vand.u32 2147483647, %v332
        %vm343 = vcmp.eq.f32.partialorder %v342, 8.507059e+37
        %v344 = vand.u32 %v332, 2147483648
        %v345 = vor.u32 1.1754944e-38, %v344
        %v346 = vsel %vm343, %v345, %v341
        %v347 = vmul.f32 1.0, %v346
        %v350 = vperm.slane %v259, %v271
        %v351 = vperm.slane %v262, %v273
        %v352 = vsel %vm275, %v351, %v350
        %v353 = vsel %vm277, %v352, 0
        %355 = vmatpush.msra.mxu0 0.0
        %356 = vmatpush.msra.mxu0 0.0
        %357 = vmatpush.msra.mxu0 0.0
        %358 = vmatpush.msra.mxu0 0.0
        %359 = vmatpush.msra.mxu0 0.0
        %360 = vmatpush.msra.mxu0 0.0
        %361 = vmatpush.msra.mxu0 0.0
        %362 = vmatpush.msra.mxu0 0.0
        %363 = vmatpush.msra.mxu0 0.0
        %364 = vmatpush.msra.mxu0 0.0
        %365 = vmatpush.msra.mxu0 0.0
        %366 = vmatpush.msra.mxu0 0.0
        %367 = vmatpush.msra.mxu0 0.0
        %368 = vmatpush.msra.mxu0 0.0
        %369 = vmatpush.msra.mxu0 %v264
        %370 = vmatpush.msra.mxu0 %v263
        %371 = vmatmul.f32.gmra.mxu0 %v353
        %v372 = vpop.f32.mrf.mxu0
        %v373 = vadd.f32 %v265, %v372
        %374 = vdwg.mxu0
        %v375 = vmax.f32 %v373, 0.0
        %v377 = vsel %vm301, %v375, 0
        %379 = vmatpush.msra.mxu0 0.0
        %380 = vmatpush.msra.mxu0 0.0
        %381 = vmatpush.msra.mxu0 0.0
        %382 = vmatpush.msra.mxu0 0.0
        %383 = vmatpush.msra.mxu0 0.0
        %384 = vmatpush.msra.mxu0 0.0
        %385 = vmatpush.msra.mxu0 0.0
        %386 = vmatpush.msra.mxu0 0.0
        %387 = vmatpush.msra.mxu0 0.0
        %388 = vmatpush.msra.mxu0 0.0
        %389 = vmatpush.msra.mxu0 0.0
        %390 = vmatpush.msra.mxu0 0.0
        %391 = vmatpush.msra.mxu0 0.0
        %392 = vmatpush.msra.mxu0 0.0
        %393 = vmatpush.msra.mxu0 0.0
        %394 = vmatpush.msra.mxu0 %v307
        %395 = vmatmul.f32.gmra.mxu0 %v377
        %v396 = vpop.f32.mrf.mxu0
        %v397 = vadd.f32 %v267, %v396
        %398 = vdwg.mxu0
        %v399 = vxor.u32 %v397, 2147483648
        %v400 = vmul.f32 %v399, 1.442695
        %v401 = vpow.pop %v400
        %v402 = vadd.f32 %v401, 1.0
        %v403 = vrcp.pop %v402
        %v404 = vmul.f32 %v402, %v403
        %v405 = vsub.f32 1.0, %v404
        %v406 = vmul.f32 %v403, %v405
        %v407 = vadd.f32 %v403, %v406
        %vm408 = vweird.f32 %v402
        %vm409 = vweird.f32 %v403
        %vm410 = vmor %vm408, %vm409
        %v411 = vsel %vm410, %v403, %v407
        %v412 = vand.u32 2147483647, %v402
        %vm413 = vcmp.eq.f32.partialorder %v412, 8.507059e+37
        %v414 = vand.u32 %v402, 2147483648
        %v415 = vor.u32 1.1754944e-38, %v414
        %v416 = vsel %vm413, %v415, %v411
        %v417 = vmul.f32 1.0, %v416
        %v418 = vadd.f32 %v347, %v417
        %v419 = vperm.slane %v418, 0
        %v420 = vlaneseq
        %v421 = vshrl.u32 %v420, 7
        %423 = vset.pattern.permute.xlu0 %v421
        %424 = vperm.xlu0 %423, %v419
        %v425 = vpop.permute.xlu0 %424
        %v426 = vlaneseq
        %v427 = vshrl.u32 %v426, 7
        %v428 = vadd.s32 %v427, 8
        %429 = vset.pattern.permute.xlu0 %v428
        %430 = vperm.xlu0 %429, %v419
        %v431 = vpop.permute.xlu0 %430
        %v432 = vmul.f32 %v245, %v425
        %v433 = vmul.f32 %v246, %v425
        %v434 = vmul.f32 %v247, %v431
        %v435 = vmul.f32 %v248, %v431
        %436 = vst [vmem:[%s244] sm:$0xff] %v432
        %437 = vst [vmem:[%s244 + $0x8] sm:$0xff] %v433
        %438 = vst [vmem:[%s244 + $0x10] sm:$0xff] %v434
        %439 = vst [vmem:[%s244 + $0x18] sm:$0xff] %v435
        %s440 = sand.u32 %s140, 1
        %s441 = scalar_lea.sflag [#allocation4], %s440
        %s442 = sand.u32 %s140, 1
        %s443 = smul.addr %s442, 32
        %s444 = scalar_lea.vmem [#allocation5], %s443
        // Predicated region
        $region45: #{tpu_custom_call.1} parent=39 // pred_check
          %p445 = pneg %p150
        $region46: #{tpu_custom_call.1} parent=39 // pred_check_branch
          %447 = sbr.rel (%p445) target = $region48
        $region47: #{tpu_custom_call.1} parent=39 // pred_region
          %449 = vsyncadd %s441, 0
          %s450 = smul.addr %s22, 4
          %s451 = smul.addr %s450, 8
          %s452 = scalar_lea.hbm %s5, %s451
          %s453 = sshll.u32 %s444, 4
          %s454 = int_to_ptr.vmem [resolvable:$true] %s453
          %s455 = sshll.u32 %s452, 4
          %s456 = int_to_ptr.hbm [resolvable:$true] %s455
          %461 = dma.vmem_to_hbm [thread:$0]  %s454, 512, %s456, %s441, 256, 256, 16
        $region48: #{tpu_custom_call.1} parent=39 // pred_fallthru
          _
      $region40: #{tpu_custom_call.1} parent=5 // pred_fallthru
        _
      %p462 = scmp.le.s32.totalorder 2, %s17
      // Predicated region
      $region49: #{tpu_custom_call.1} parent=5 // pred_check
        %p463 = pneg %p462
      $region50: #{tpu_custom_call.1} parent=5 // pred_check_branch
        %465 = sbr.rel (%p463) target = $region52
      $region51: #{tpu_custom_call.1} parent=5 // pred_region
        %s466 = ssub.s32 %s17, 2
        // Predicated region
        $region53: #{tpu_custom_call.1} parent=51 // pred_check
          %p467 = pneg %p156
        $region54: #{tpu_custom_call.1} parent=51 // pred_check_branch
          %469 = sbr.rel (%p467) target = $region56
        $region55: #{tpu_custom_call.1} parent=51 // pred_region
          %s470 = sand.u32 %s141, 1
          %s471 = scalar_lea.sflag [#allocation4], %s470
          %s472 = sand.u32 %s141, 1
          %s473 = smul.addr %s472, 32
          %s474 = scalar_lea.vmem [#allocation5], %s473
          %476 = dma.done %s471, 512
        $region56: #{tpu_custom_call.1} parent=51 // pred_fallthru
          _
      $region52: #{tpu_custom_call.1} parent=5 // pred_fallthru
        _
    $region6: #{tpu_custom_call.1} parent=1 // loop_footer
      %s21 = sadd.s32 1, %s17
    $region7: #{tpu_custom_call.1} parent=1 // loop_footer_branch
      %16 = sbr.rel target = $region3
    $region8: #{tpu_custom_call.1} parent=1 // loop_exit
      _
    %477 = vsyncpa [#allocation3], 1
    %s478 = scalar_lea.sflag [#allocation3], 1
    %479 = vsyncpa %s478, 1
    %480 = vsyncpa [#allocation4], 1
    %s481 = scalar_lea.sflag [#allocation4], 1
    %482 = vsyncpa %s481, 1

</llo_original>
